<compile_context>
chip_gen: v7x
topology: tpu7x:2x2x1
jax: 0.10.0
libtpu: 0.0.40
codegen_flags: <defaults>
</compile_context>

<pallas_src>
import functools

import jax
import jax.numpy as jnp
from jax import lax
from jax.experimental import pallas as pl
from jax.experimental.pallas import tpu as pltpu

BN_EPS = 1e-3


def _round_up(v, m):
    return -(-v // m) * m


@functools.cache
def _roll_matches_numpy():
    """One-time probe: does pltpu.roll follow jnp.roll's shift convention?

    The tap convolutions depend on the rotate direction; this tiny (8,128)
    kernel pins the convention down at runtime so the row shifts are correct
    either way (cached, negligible cost)."""
    x = jnp.broadcast_to(jnp.arange(8, dtype=jnp.float32)[:, None], (8, 128))

    def k(x_ref, o_ref):
        o_ref[...] = pltpu.roll(x_ref[...], shift=1, axis=0)

    y = pl.pallas_call(
        k, out_shape=jax.ShapeDtypeStruct((8, 128), jnp.float32))(x)
    # jnp.roll(x, 1, axis=0)[0] == x[7]
    return bool(y[0, 0] == 7.0)


# ----------------------------------------------------------------------------
# Pallas kernel: whole InceptionA block for a block of batch elements.
#
# Row layout: NB batch elements of L rows each, flattened to M = NB*L rows
# (no halo rows).  Channels live on the lane axis.
# ----------------------------------------------------------------------------
def _inception_a_kernel(
    x_ref,                                   # (M, Cin)   channels-last rows
    wh_ref,                                  # (Cin, 176+P) packed 1x1 head
    s1_ref, b1_ref,                          # (1, 64)  branch1x1 BN
    s3a_ref, b3a_ref,                        # (1, 64)  branch3x3dbl_1 BN
    s5a_ref, b5a_ref,                        # (1, 48)  branch5x5_1 BN
    sp_ref, bp_ref,                          # (1, P)   branch_pool BN
    w5b_ref, s5b_ref, b5b_ref,               # (240, 64), (1,64), (1,64)
    w3b_ref, s3b_ref, b3b_ref,               # (192, 96), (1,96), (1,96)
    w3c_ref, s3c_ref, b3c_ref,               # (288, 96), (1,96), (1,96)
    o_ref,                                   # (M, 128 + round_up(96+P, 128))
    *, seg_len, roll_like_numpy,             # static: L, roll convention
):
    M = x_ref.shape[0]
    P = sp_ref.shape[1]
    cdt = wh_ref.dtype                       # MXU compute dtype (bf16 or f32)

    # Row position of every row inside its length-L batch segment.
    pos = lax.broadcasted_iota(jnp.int32, (M, 1), 0) % seg_len

    def shift_rows(h, d):
        """result[i] = h[i + d] within the segment, 0 outside ('same' padding).

        pltpu.roll keeps the shift on the otherwise-idle XLU; wrapped rows
        (segment boundaries and block ends) are zeroed by the validity mask,
        reproducing Conv1d / avg_pool1d zero padding exactly."""
        if d == 0:
            return h
        amt = (-d) % M if roll_like_numpy else d % M
        rolled = pltpu.roll(h, shift=amt, axis=0)
        valid = jnp.logical_and(pos + d >= 0, pos + d < seg_len)
        return jnp.where(valid, rolled, jnp.zeros_like(rolled))

    def bn_relu(y, s_ref, b_ref):            # folded inference BN + ReLU, f32
        return jnp.maximum(y * s_ref[...] + b_ref[...], 0.0)

    def tap_conv(h, w_ref):
        """K-tap 'same' conv as ONE packed MXU contraction.

        h: (M, C) f32.  w_ref: (K*C, Cout); row-block k holds the tap at
        offset d = k - pad.  The K shifted copies of h are concatenated along
        the contraction axis: (M, K*C) @ (K*C, Cout)."""
        C = h.shape[1]
        K = w_ref.shape[0] // C
        pad = (K - 1) // 2
        hp = jnp.concatenate(
            [shift_rows(h, d) for d in range(-pad, pad + 1)], axis=-1)
        return jnp.dot(hp.astype(cdt), w_ref[...],
                       preferred_element_type=jnp.float32)

    # ---- fused 1x1 head of all four branches: one MXU matmul ---------------
    # lanes: [br1 0:64 | br3 head 64:128 | br5 head 128:176 | pool 176:176+P]
    x = x_ref[...].astype(cdt)
    yhead = jnp.dot(x, wh_ref[...], preferred_element_type=jnp.float32)

    # ---- branch1x1 + branch5x5  ->  output lanes [0, 128) -------------------
    br1 = bn_relu(yhead[:, 0:64], s1_ref, b1_ref)                     # (M, 64)
    h5 = bn_relu(yhead[:, 128:176], s5a_ref, b5a_ref)                 # (M, 48)
    br5 = bn_relu(tap_conv(h5, w5b_ref), s5b_ref, b5b_ref)            # (M, 64)
    o_ref[:, 0:128] = jnp.concatenate([br1, br5], axis=-1).astype(o_ref.dtype)

    # ---- branch3x3dbl + branch_pool  ->  output lanes [128, ...) ------------
    h3 = bn_relu(yhead[:, 64:128], s3a_ref, b3a_ref)                  # (M, 64)
    h3b = bn_relu(tap_conv(h3, w3b_ref), s3b_ref, b3b_ref)            # (M, 96)
    br3 = bn_relu(tap_conv(h3b, w3c_ref), s3c_ref, b3c_ref)           # (M, 96)

    # avg_pool1d(k=3, s=1, p=1, count_include_pad): the 1/3 is folded into the
    # packed pool-branch 1x1 weight, so the pool is a 3-shift masked sum.
    yp = yhead[:, 176:176 + P]                                        # (M, P)
    pooled = shift_rows(yp, -1) + yp + shift_rows(yp, 1)
    brp = bn_relu(pooled, sp_ref, bp_ref)                             # (M, P)

    tail = jnp.concatenate([br3, brp], axis=-1)                       # (M,96+P)
    lane_pad = o_ref.shape[1] - 128 - tail.shape[1]
    if lane_pad:              # keep the second slab store full 128-lane width
        tail = jnp.concatenate(
            [tail, jnp.zeros((M, lane_pad), tail.dtype)], axis=-1)
    o_ref[:, 128:] = tail.astype(o_ref.dtype)


# ----------------------------------------------------------------------------
# Batch-block auto-sizing (VMEM budget + >=2 grid steps + (8,128) rule)
# ----------------------------------------------------------------------------
def _choose_batch_block(N, L, cin, c_store, in_itemsize, out_itemsize):
    vmem_budget = 20 << 20        # conservative vs v7x 64 MiB / 32 MiB scoped
    # double-buffered in/out blocks + generous allowance for the f32
    # intermediates (yhead, packed tap activations, branch outputs).
    row_bytes = 2 * cin * in_itemsize + 2 * c_store * out_itemsize + 8192
    rows_cap = min(1024, max(8, vmem_budget // row_bytes))
    divisors = [d for d in range(1, N + 1) if N % d == 0]
    cands = [d for d in divisors
             if (d == N or (d * L) % 8 == 0) and d * L <= rows_cap]
    if not cands:
        # TODO(synk): add an L-axis halo-overlapped grid dimension for very
        # long sequences instead of falling back to one batch element per step.
        return 1 if (N == 1 or L % 8 == 0) else N
    multi = [d for d in cands if N // d >= 2]      # prefer >= 2 grid steps
    return max(multi) if multi else max(cands)


# ----------------------------------------------------------------------------
# Wrappers
# ----------------------------------------------------------------------------
def inception_a_pallas_nlc(x_nlc, kparams, pool_features, *, batch_block=None,
                           compute_dtype=jnp.bfloat16, out_dtype=None):
    """Channels-last entry point: x_nlc (N, L, Cin) -> (N, L, 64+64+96+P)."""
    N, L, Cin = x_nlc.shape
    c_out = 64 + 64 + 96 + pool_features
    out_dtype = compute_dtype if out_dtype is None else out_dtype

    # output lane layout: [br1|br5] (128 lanes) then [br3|brp] padded to 128k
    c_store = 128 + _round_up(96 + pool_features, 128)

    if batch_block is None:
        NB = _choose_batch_block(N, L, Cin, c_store,
                                 jnp.dtype(x_nlc.dtype).itemsize,
                                 jnp.dtype(out_dtype).itemsize)
    else:
        NB = batch_block
    assert N % NB == 0, "batch_block must divide N"
    M = NB * L
    assert NB == N or M % 8 == 0, "NB*L must be a multiple of 8 when NB < N"

    x_flat = x_nlc.reshape(N * L, Cin)        # free reshape (leading dims)
    plist = kparams                           # ordered flat parameter list

    def full_spec(shape):
        nd = len(shape)
        return pl.BlockSpec(shape, lambda n, _nd=nd: (0,) * _nd)

    in_specs = [pl.BlockSpec((M, Cin), lambda n: (n, 0))]
    in_specs += [full_spec(p.shape) for p in plist]

    out_flat = pl.pallas_call(
        functools.partial(_inception_a_kernel, seg_len=L,
                          roll_like_numpy=_roll_matches_numpy()),
        out_shape=jax.ShapeDtypeStruct((N * L, c_store), out_dtype),
        grid=(N // NB,),
        in_specs=in_specs,
        out_specs=pl.BlockSpec((M, c_store), lambda n: (n, 0)),
        compiler_params=pltpu.CompilerParams(
            dimension_semantics=("parallel",)),        # dual-TC split on v7x
    )(x_flat, *plist)

    out = out_flat.reshape(N, L, c_store)
    if c_store != c_out:
        # TODO(synk): consumers that accept the 128-padded channel layout
        # should skip this slice (it costs an extra HBM copy).
        out = out[..., :c_out]
    return out


def inception_a_pallas(x_ncl, kparams, pool_features, **kwargs):
    """PyTorch-layout adapter (N, Cin, L) -> (N, Ctot, L).

    The transposes are compatibility-only; prefer inception_a_pallas_nlc
    (channels-last) to avoid the two full-tensor HBM round trips."""
    x_nlc = jnp.transpose(x_ncl, (0, 2, 1))
    out_nlc = inception_a_pallas_nlc(x_nlc, kparams, pool_features, **kwargs)
    return jnp.transpose(out_nlc, (0, 2, 1))


# ----------------------------------------------------------------------------
# Deterministic parameter construction (BasicConv1d = conv(no bias) + BN + ReLU)
# ----------------------------------------------------------------------------
def make_params(key, in_channels, pool_features):
    layer_defs = [
        ("b1",  in_channels, 64, 1),
        ("b5a", in_channels, 48, 1),
        ("b5b", 48,          64, 5),
        ("b3a", in_channels, 64, 1),
        ("b3b", 64,          96, 3),
        ("b3c", 96,          96, 3),
        ("bp",  in_channels, pool_features, 1),
    ]
    torch_params = {}
    for name, cin, cout, k in layer_defs:
        key, kw, kg, kb, km, kv = jax.random.split(key, 6)
        w = 0.1 * jax.random.normal(kw, (cout, cin, k), jnp.float32)   # OIK
        gamma = 1.0 + 0.1 * jax.random.normal(kg, (cout,), jnp.float32)
        beta = 0.1 * jax.random.normal(kb, (cout,), jnp.float32)
        mean = 0.1 * jax.random.normal(km, (cout,), jnp.float32)
        var = jnp.abs(jax.random.normal(kv, (cout,), jnp.float32)) + 0.5
        torch_params[name] = (w, gamma, beta, mean, var)
    return torch_params


def pack_kernel_params(torch_params, pool_features, compute_dtype):
    """Fold BN (inference) into scale/bias, pack weights for the kernel."""
    def fold(name):
        w, gamma, beta, mean, var = torch_params[name]
        scale = gamma / jnp.sqrt(var + BN_EPS)
        bias = beta - mean * scale
        return (w, scale.reshape(1, -1).astype(jnp.float32),
                bias.reshape(1, -1).astype(jnp.float32))

    def w_1x1(w):                       # torch (Cout, Cin, 1) -> (Cin, Cout)
        return jnp.transpose(w[:, :, 0], (1, 0))

    def w_tap_packed(w):
        # torch (Cout, Cin, K) -> (K*Cin, Cout); row-block k is the tap at
        # offset d = k - pad, matching the kernel's shift/concat order.
        cout, cin, k = w.shape
        wt = jnp.transpose(w, (2, 1, 0))                 # (K, Cin, Cout)
        return wt.reshape(k * cin, cout).astype(compute_dtype)

    w1, s1, b1 = fold("b1")
    w3a, s3a, b3a = fold("b3a")
    w5a, s5a, b5a = fold("b5a")
    wp, sp, bp = fold("bp")
    w5b, s5b, b5b = fold("b5b")
    w3b, s3b, b3b = fold("b3b")
    w3c, s3c, b3c = fold("b3c")

    # Fused 1x1 head: [branch1x1 | branch3x3dbl_1 | branch5x5_1 | branch_pool/3]
    # (avg-pool 1/3 folded into the pool-branch weight; all are linear).
    wh = jnp.concatenate(
        [w_1x1(w1), w_1x1(w3a), w_1x1(w5a), w_1x1(wp) / 3.0],
        axis=1).astype(compute_dtype)

    return [wh,
            s1, b1, s3a, b3a, s5a, b5a, sp, bp,
            w_tap_packed(w5b), s5b, b5b,
            w_tap_packed(w3b), s3b, b3b,
            w_tap_packed(w3c), s3c, b3c]


# ----------------------------------------------------------------------------
# Pure-JAX reference (mirrors the PyTorch forward, BN in eval mode)
# ----------------------------------------------------------------------------
def ref_forward(x, torch_params):
    def bconv(h, name, pad):
        w, gamma, beta, mean, var = torch_params[name]
        y = lax.conv_general_dilated(h, w, (1,), [(pad, pad)],
                                     dimension_numbers=("NCH", "OIH", "NCH"))
        scale = gamma / jnp.sqrt(var + BN_EPS)
        bias = beta - mean * scale
        y = y * scale[None, :, None] + bias[None, :, None]
        return jnp.maximum(y, 0.0)

    br1 = bconv(x, "b1", 0)
    br5 = bconv(bconv(x, "b5a", 0), "b5b", 2)
    br3 = bconv(bconv(bconv(x, "b3a", 0), "b3b", 1), "b3c", 1)

    L = x.shape[2]
    xp = jnp.pad(x, ((0, 0), (0, 0), (1, 1)))
    pooled = (xp[:, :, 0:L] + xp[:, :, 1:L + 1] + xp[:, :, 2:L + 2]) / 3.0
    brp = bconv(pooled, "bp", 0)
    return jnp.concatenate([br1, br5, br3, brp], axis=1)


# ----------------------------------------------------------------------------
if __name__ == "__main__":
    N, Cin, L = 2, 4, 16
    pool_features = 32
    c_out_total = 64 + 64 + 96 + pool_features

    key = jax.random.PRNGKey(0)
    kx, kp = jax.random.split(key)
    x = jax.random.normal(kx, (N, Cin, L), jnp.float32)
    torch_params = make_params(kp, Cin, pool_features)
    ref = jax.block_until_ready(ref_forward(x, torch_params))

    # 1) exact-semantics check: f32 matmuls, f32 output
    p_f32 = pack_kernel_params(torch_params, pool_features, jnp.float32)
    out_f32 = jax.block_until_ready(
        inception_a_pallas(x, p_f32, pool_features,
                           compute_dtype=jnp.float32, out_dtype=jnp.float32))
    assert out_f32.shape == (N, c_out_total, L), out_f32.shape
    err_f32 = float(jnp.max(jnp.abs(out_f32 - ref)))
    assert jnp.allclose(out_f32, ref, rtol=1e-4, atol=1e-4), err_f32

    # 2) fast path: bf16 matmuls (f32 accumulation) + bf16 output
    p_bf16 = pack_kernel_params(torch_params, pool_features, jnp.bfloat16)
    out_bf16 = jax.block_until_ready(
        inception_a_pallas(x, p_bf16, pool_features,
                           compute_dtype=jnp.bfloat16))
    assert out_bf16.shape == (N, c_out_total, L), out_bf16.shape
    out_bf16_f32 = out_bf16.astype(jnp.float32)
    err_bf16 = float(jnp.max(jnp.abs(out_bf16_f32 - ref)))
    assert jnp.allclose(out_bf16_f32, ref, rtol=1e-1, atol=1e-1), err_bf16

    print("KERNEL_OK")
</pallas_src>

<mosaic_0001>
module attributes {stable_mosaic.version = 11 : i64} {
  func.func @k(%arg0: memref<8x128xf32, #tpu.memory_space<vmem>>, %arg1: memref<8x128xf32, #tpu.memory_space<vmem>>) attributes {dimension_semantics = [], scalar_prefetch = 0 : i64, scratch_operands = 0 : i64, tpu.core_type = #tpu.core_type<tc>} {
    %c0 = arith.constant 0 : index
    %c0_0 = arith.constant 0 : index
    %0 = vector.load %arg0[%c0, %c0_0] : memref<8x128xf32, #tpu.memory_space<vmem>>, vector<8x128xf32>
    %c1_i32 = arith.constant 1 : i32
    %1 = tpu.dynamic_rotate %0 by %c1_i32 dim 0 : vector<8x128xf32>, i32 -> vector<8x128xf32>
    %c0_1 = arith.constant 0 : index
    %c0_2 = arith.constant 0 : index
    %2 = vector.load %arg1[%c0_1, %c0_2] : memref<8x128xf32, #tpu.memory_space<vmem>>, vector<8x128xf32>
    tpu.vector_store %arg1[%c0_1, %c0_2], %1 {strides = array<i32>} : memref<8x128xf32, #tpu.memory_space<vmem>>, vector<8x128xf32>,
    return
  }
}

</mosaic_0001>

<llo_original>
// kernel: tpu_custom_call.1
$region0: #{tpu_custom_call.1}
  #allocation0 [shape = 'u32[]', space=smem, size = 0x4, offset = 0x4, fixed_abs, tag = 'smem constant byte address 0x4 - core index']
  #allocation1 [shape = 'u32[144,128]{1,0:T(1,128)}', space=vmem, size = 0x12000, scoped, tag = 'internal scratch']
  %s0 = inlined_call_operand.hbm [shape: f32[8,128], index: 0, kind: input, shape index: {}]
  %s1 = inlined_call_operand.hbm [shape: f32[8,128], index: 1, kind: output, shape index: {}]
  %s2 = sld [smem:[#allocation0]]
  $region18: #{tpu_custom_call.1} parent=0
    _
  %s4 = ssub.s32 1, %s2
  %s5 = scalar_select 0, %s4, %s2
  $region1: #{tpu_custom_call.1} parent=0
    #allocation2 [shape = 'u8[4096]{0}', space=vmem, size = 0x1000, scoped, tag = 'input window, operand 0, single buffered']
    #allocation3 [shape = 's32[1]{0}', space=sflag, size = 0x4, scoped, tag = 'scoped memory for tpu_custom_call.1']
    #allocation4 [shape = 's32[1]{0}', space=sflag, size = 0x4, scoped, tag = 'scoped memory for tpu_custom_call.1']
    #allocation5 [shape = 'u8[4096]{0}', space=vmem, size = 0x1000, scoped, tag = 'output window, operand 0, single buffered']
    %6 = vsyncpa [#allocation3], 0
    %7 = vsyncpa [#allocation4], 0
    // Predicated region
    $region2: #{tpu_custom_call.1} parent=1 // pred_check
      _
    $region3: #{tpu_custom_call.1} parent=1 // pred_check_branch
      %9 = sbr.rel (0) target = $region5
    $region4: #{tpu_custom_call.1} parent=1 // pred_region
      %s11 = ssub.s32 128, 128
      %12 = vsyncadd [#allocation3], %s11
      %s14 = sshll.u32 [#allocation2], 4
      %s15 = int_to_ptr.vmem [resolvable:$true] %s14
      %17 = dma.hbm_to_vmem [thread:$0]  %s0, 128, %s15, [#allocation3]
    $region5: #{tpu_custom_call.1} parent=1 // pred_fallthru
      _
    // Predicated region
    $region6: #{tpu_custom_call.1} parent=1 // pred_check
      _
    $region7: #{tpu_custom_call.1} parent=1 // pred_check_branch
      %19 = sbr.rel (0) target = $region9
    $region8: #{tpu_custom_call.1} parent=1 // pred_region
      %20 = dma.done [#allocation3], 128
    $region9: #{tpu_custom_call.1} parent=1 // pred_fallthru
      _
    %v21 = vld [vmem:[#allocation2] sm:$0xff]
    %v22 = vrot.slane %v21, 7
    %23 = vst [vmem:[#allocation5] sm:$0xff] %v22
    // Predicated region
    $region10: #{tpu_custom_call.1} parent=1 // pred_check
      _
    $region11: #{tpu_custom_call.1} parent=1 // pred_check_branch
      %25 = sbr.rel (0) target = $region13
    $region12: #{tpu_custom_call.1} parent=1 // pred_region
      %s27 = ssub.s32 128, 128
      %28 = vsyncadd [#allocation4], %s27
      %s30 = sshll.u32 [#allocation5], 4
      %s31 = int_to_ptr.vmem [resolvable:$true] %s30
      %33 = dma.vmem_to_hbm [thread:$0]  %s31, 128, %s1, [#allocation4]
    $region13: #{tpu_custom_call.1} parent=1 // pred_fallthru
      _
    // Predicated region
    $region14: #{tpu_custom_call.1} parent=1 // pred_check
      _
    $region15: #{tpu_custom_call.1} parent=1 // pred_check_branch
      %35 = sbr.rel (0) target = $region17
    $region16: #{tpu_custom_call.1} parent=1 // pred_region
      %36 = dma.done [#allocation4], 128
    $region17: #{tpu_custom_call.1} parent=1 // pred_fallthru
      _
    %37 = vsyncpa [#allocation3], 1
    %38 = vsyncpa [#allocation4], 1

</llo_original>
